<compile_context>
chip_gen: v6e
topology: v6e:2x2x1
jax: 0.10.0
libtpu: 0.0.40
codegen_flags: <defaults>
</compile_context>

<pallas_src>
import functools

import jax
import jax.numpy as jnp
from jax.experimental import pallas as pl
from jax.experimental.pallas import tpu as pltpu


def _focal_ce_kernel(logits_ref, target_ref, partial_ref, acc_ref, *, num_classes):
    """Per-(sample, HW-tile) softmax cross-entropy, accumulated per lane.

    logits_ref : (1, C, TILE) VMEM tile (classes on sublanes, HW on lanes)
    target_ref : (1, 1, TILE) int32 VMEM tile
    partial_ref: (1, 1, 1)    f32 output block (same block across the tile axis)
    acc_ref    : (1, TILE)    f32 VMEM scratch -- per-lane running CE sums
    """
    t = pl.program_id(1)

    @pl.when(t == 0)
    def _():
        acc_ref[...] = jnp.zeros_like(acc_ref)

    x = logits_ref[0].astype(jnp.float32)       # (C, TILE), upcast in-kernel (bf16 ok)
    tgt = target_ref[0]                         # (1, TILE) int32

    rows = [x[c:c + 1, :] for c in range(num_classes)]   # C x (1, TILE)

    # max over classes (unrolled, VPU only)
    m = rows[0]
    for c in range(1, num_classes):
        m = jnp.maximum(m, rows[c])

    # sum(exp) and target-logit pick (unrolled, VPU/EUP only, no XLU per step)
    sum_exp = jnp.exp(rows[0] - m)
    picked = jnp.where(tgt == 0, rows[0], 0.0)
    for c in range(1, num_classes):
        sum_exp = sum_exp + jnp.exp(rows[c] - m)
        picked = picked + jnp.where(tgt == c, rows[c], 0.0)

    lse = m + jnp.log(sum_exp)                  # (1, TILE)
    acc_ref[...] += lse - picked                # per-lane partial CE sums

    @pl.when(t == pl.num_programs(1) - 1)
    def _():
        # one cross-lane reduce per sample, only on the last tile
        partial_ref[...] = jnp.sum(acc_ref[...]).reshape(1, 1, 1)


def _pick_tile_hw(hw, num_classes, target_block_bytes=2 << 20):
    """Largest lane-tile (multiple of 128, divisor of hw) with ~2 MiB of logits."""
    max_elems = max(128, (target_block_bytes // (4 * num_classes)) // 128 * 128)
    if hw <= max_elems:
        return hw
    tile = max_elems
    while tile >= 128:
        if hw % tile == 0:
            return tile
        tile -= 128
    return hw  # fallback: whole row per step


def focal_loss_orig(output_nchw, target_nhw, focusing_param=2.0, balance_param=0.25):
    """output_nchw: (N, C, H, W) float32/bf16 logits; target_nhw: (N, H, W) int labels."""
    N, C, H, W = output_nchw.shape
    HW = H * W
    M = N * HW

    # Free reshapes (no transpose, no extra HBM pass).
    logits = output_nchw.reshape(N, C, HW)
    targets = target_nhw.reshape(N, 1, HW).astype(jnp.int32)

    tile_hw = _pick_tile_hw(HW, C)
    assert HW % tile_hw == 0
    n_tiles = HW // tile_hw

    kernel = functools.partial(_focal_ce_kernel, num_classes=C)

    partials = pl.pallas_call(
        kernel,
        out_shape=jax.ShapeDtypeStruct((N, 1, 1), jnp.float32),
        grid_spec=pltpu.PrefetchScalarGridSpec(
            num_scalar_prefetch=0,
            grid=(N, n_tiles),
            in_specs=[
                pl.BlockSpec((1, C, tile_hw), lambda n, t: (n, 0, t)),
                pl.BlockSpec((1, 1, tile_hw), lambda n, t: (n, 0, t)),
            ],
            out_specs=pl.BlockSpec((1, 1, 1), lambda n, t: (n, 0, 0)),
            scratch_shapes=[pltpu.VMEM((1, tile_hw), jnp.float32)],
        ),
        compiler_params=pltpu.CompilerParams(
            dimension_semantics=("parallel", "arbitrary"),
        ),
    )(logits, targets)

    # Tiny final scalar math on the N per-sample partial CE sums (XLA side).
    ce = jnp.sum(partials) / jnp.float32(M)          # mean cross-entropy
    logpt = -ce
    pt = jnp.exp(logpt)
    focal = -((1.0 - pt) ** jnp.float32(focusing_param)) * logpt
    return jnp.float32(balance_param) * focal        # scalar


def _reference(output_nchw, target_nhw, focusing_param=2.0, balance_param=0.25):
    """Pure-JAX reference of FocalLoss_orig.forward (F.cross_entropy is mean-reduced)."""
    N, C, H, W = output_nchw.shape
    logits = jnp.transpose(output_nchw, (0, 2, 3, 1)).reshape(-1, C)
    tgt = target_nhw.reshape(-1)
    logp = jax.nn.log_softmax(logits, axis=-1)
    ce = -jnp.mean(jnp.take_along_axis(logp, tgt[:, None], axis=-1))
    logpt = -ce
    pt = jnp.exp(logpt)
    return balance_param * (-((1.0 - pt) ** focusing_param) * logpt)


if __name__ == "__main__":
    key = jax.random.PRNGKey(0)
    k1, k2 = jax.random.split(key)

    N, C, H, W = 2, 4, 16, 16
    output = jax.random.normal(k1, (N, C, H, W), dtype=jnp.float32)
    target = jax.random.randint(k2, (N, H, W), 0, C, dtype=jnp.int32)

    loss = focal_loss_orig(output, target, focusing_param=2.0, balance_param=0.25)
    loss = jax.block_until_ready(loss)

    ref = _reference(output, target)
    assert jnp.allclose(loss, ref, rtol=1e-5, atol=1e-6), (loss, ref)

    print("KERNEL_OK")
</pallas_src>

<mosaic_0001>
module attributes {stable_mosaic.version = 11 : i64} {
  func.func @_focal_ce_kernel(%arg0: i32, %arg1: i32, %arg2: memref<1x4x256xf32, #tpu.memory_space<vmem>>, %arg3: memref<1x1x256xi32, #tpu.memory_space<vmem>>, %arg4: memref<1x1x1xf32, #tpu.memory_space<vmem>>, %arg5: memref<1x256xf32, #tpu.memory_space<vmem>>) attributes {dimension_semantics = [#tpu.dimension_semantics<parallel>, #tpu.dimension_semantics<arbitrary>], iteration_bounds = array<i64: 2, 1>, scalar_prefetch = 0 : i64, scratch_operands = 1 : i64, tpu.core_type = #tpu.core_type<tc>, window_params = [{transform_indices = @transform_0, window_bounds = array<i64: 1, 4, 256>}, {transform_indices = @transform_1, window_bounds = array<i64: 1, 1, 256>}, {transform_indices = @transform_2, window_bounds = array<i64: 1, 1, 1>}]} {
    %c0_i32 = arith.constant 0 : i32
    %0 = arith.cmpi eq, %arg1, %c0_i32 : i32
    %1 = arith.extui %0 : i1 to i32
    %c0_i32_0 = arith.constant 0 : i32
    %2 = arith.cmpi ne, %1, %c0_i32_0 : i32
    scf.if %2 {
      %cst_16 = arith.constant 0.000000e+00 : f32
      %53 = vector.broadcast %cst_16 : f32 to vector<1x256xf32>
      %c0_17 = arith.constant 0 : index
      %c0_18 = arith.constant 0 : index
      %54 = vector.load %arg5[%c0_17, %c0_18] : memref<1x256xf32, #tpu.memory_space<vmem>>, vector<1x256xf32>
      tpu.vector_store %arg5[%c0_17, %c0_18], %53 {strides = array<i32>} : memref<1x256xf32, #tpu.memory_space<vmem>>, vector<1x256xf32>,
    } else {
    }
    %c0 = arith.constant 0 : index
    %c0_1 = arith.constant 0 : index
    %c0_2 = arith.constant 0 : index
    %3 = vector.load %arg2[%c0, %c0_1, %c0_2] : memref<1x4x256xf32, #tpu.memory_space<vmem>>, vector<1x4x256xf32>
    %4 = vector.shape_cast %3 : vector<1x4x256xf32> to vector<4x256xf32>
    %c0_3 = arith.constant 0 : index
    %c0_4 = arith.constant 0 : index
    %c0_5 = arith.constant 0 : index
    %5 = vector.load %arg3[%c0_3, %c0_4, %c0_5] : memref<1x1x256xi32, #tpu.memory_space<vmem>>, vector<1x1x256xi32>
    %6 = vector.shape_cast %5 : vector<1x1x256xi32> to vector<1x256xi32>
    %7 = vector.extract_strided_slice %4 {offsets = [0, 0], sizes = [1, 256], strides = [1, 1]} : vector<4x256xf32> to vector<1x256xf32>
    %8 = vector.extract_strided_slice %4 {offsets = [1, 0], sizes = [1, 256], strides = [1, 1]} : vector<4x256xf32> to vector<1x256xf32>
    %9 = vector.extract_strided_slice %4 {offsets = [2, 0], sizes = [1, 256], strides = [1, 1]} : vector<4x256xf32> to vector<1x256xf32>
    %10 = vector.extract_strided_slice %4 {offsets = [3, 0], sizes = [1, 256], strides = [1, 1]} : vector<4x256xf32> to vector<1x256xf32>
    %11 = arith.maximumf %7, %8 : vector<1x256xf32>
    %12 = arith.maximumf %11, %9 : vector<1x256xf32>
    %13 = arith.maximumf %12, %10 : vector<1x256xf32>
    %14 = arith.subf %7, %13 : vector<1x256xf32>
    %15 = math.exp %14 : vector<1x256xf32>
    %c0_i32_6 = arith.constant 0 : i32
    %16 = vector.broadcast %c0_i32_6 : i32 to vector<1x256xi32>
    %17 = arith.cmpi eq, %6, %16 : vector<1x256xi32>
    %cst = arith.constant 0.000000e+00 : f32
    %18 = vector.broadcast %cst : f32 to vector<1x256xf32>
    %19 = arith.select %17, %7, %18 : vector<1x256xi1>, vector<1x256xf32>
    %20 = arith.subf %8, %13 : vector<1x256xf32>
    %21 = math.exp %20 : vector<1x256xf32>
    %22 = arith.addf %15, %21 : vector<1x256xf32>
    %c1_i32 = arith.constant 1 : i32
    %23 = vector.broadcast %c1_i32 : i32 to vector<1x256xi32>
    %24 = arith.cmpi eq, %6, %23 : vector<1x256xi32>
    %cst_7 = arith.constant 0.000000e+00 : f32
    %25 = vector.broadcast %cst_7 : f32 to vector<1x256xf32>
    %26 = arith.select %24, %8, %25 : vector<1x256xi1>, vector<1x256xf32>
    %27 = arith.addf %19, %26 : vector<1x256xf32>
    %28 = arith.subf %9, %13 : vector<1x256xf32>
    %29 = math.exp %28 : vector<1x256xf32>
    %30 = arith.addf %22, %29 : vector<1x256xf32>
    %c2_i32 = arith.constant 2 : i32
    %31 = vector.broadcast %c2_i32 : i32 to vector<1x256xi32>
    %32 = arith.cmpi eq, %6, %31 : vector<1x256xi32>
    %cst_8 = arith.constant 0.000000e+00 : f32
    %33 = vector.broadcast %cst_8 : f32 to vector<1x256xf32>
    %34 = arith.select %32, %9, %33 : vector<1x256xi1>, vector<1x256xf32>
    %35 = arith.addf %27, %34 : vector<1x256xf32>
    %36 = arith.subf %10, %13 : vector<1x256xf32>
    %37 = math.exp %36 : vector<1x256xf32>
    %38 = arith.addf %30, %37 : vector<1x256xf32>
    %c3_i32 = arith.constant 3 : i32
    %39 = vector.broadcast %c3_i32 : i32 to vector<1x256xi32>
    %40 = arith.cmpi eq, %6, %39 : vector<1x256xi32>
    %cst_9 = arith.constant 0.000000e+00 : f32
    %41 = vector.broadcast %cst_9 : f32 to vector<1x256xf32>
    %42 = arith.select %40, %10, %41 : vector<1x256xi1>, vector<1x256xf32>
    %43 = arith.addf %35, %42 : vector<1x256xf32>
    %44 = math.log %38 : vector<1x256xf32>
    %45 = arith.addf %13, %44 : vector<1x256xf32>
    %c0_10 = arith.constant 0 : index
    %c0_11 = arith.constant 0 : index
    %46 = vector.load %arg5[%c0_10, %c0_11] : memref<1x256xf32, #tpu.memory_space<vmem>>, vector<1x256xf32>
    %47 = arith.subf %45, %43 : vector<1x256xf32>
    %48 = arith.addf %46, %47 : vector<1x256xf32>
    %c0_12 = arith.constant 0 : index
    %c0_13 = arith.constant 0 : index
    %49 = vector.load %arg5[%c0_12, %c0_13] : memref<1x256xf32, #tpu.memory_space<vmem>>, vector<1x256xf32>
    tpu.vector_store %arg5[%c0_12, %c0_13], %48 {strides = array<i32>} : memref<1x256xf32, #tpu.memory_space<vmem>>, vector<1x256xf32>,
    %c0_i32_14 = arith.constant 0 : i32
    %50 = arith.cmpi eq, %arg1, %c0_i32_14 : i32
    %51 = arith.extui %50 : i1 to i32
    %c0_i32_15 = arith.constant 0 : i32
    %52 = arith.cmpi ne, %51, %c0_i32_15 : i32
    scf.if %52 {
      %c0_16 = arith.constant 0 : index
      %c0_17 = arith.constant 0 : index
      %53 = vector.load %arg5[%c0_16, %c0_17] : memref<1x256xf32, #tpu.memory_space<vmem>>, vector<1x256xf32>
      %54 = vector.shape_cast %53 : vector<1x256xf32> to vector<1x1x256xf32>
      %cst_18 = arith.constant dense<0.000000e+00> : vector<1xf32>
      %55 = vector.multi_reduction <add>, %54, %cst_18 [1, 2] : vector<1x1x256xf32> to vector<1xf32>
      %56 = vector.shape_cast %55 : vector<1xf32> to vector<1x1x1xf32>
      %57 = vector.extract %56[0, 0, 0] : f32 from vector<1x1x1xf32>
      %58 = vector.broadcast %57 : f32 to vector<1x1x1xf32>
      %c0_19 = arith.constant 0 : index
      %c0_20 = arith.constant 0 : index
      %c0_21 = arith.constant 0 : index
      %59 = vector.load %arg4[%c0_19, %c0_20, %c0_21] : memref<1x1x1xf32, #tpu.memory_space<vmem>>, vector<1x1x1xf32>
      tpu.vector_store %arg4[%c0_19, %c0_20, %c0_21], %58 {strides = array<i32>} : memref<1x1x1xf32, #tpu.memory_space<vmem>>, vector<1x1x1xf32>,
    } else {
    }
    return
  }
  func.func @transform_0(%arg0: i32, %arg1: i32) -> (i32, i32, i32) {
    %c0_i32 = arith.constant 0 : i32
    %c0_i32_0 = arith.constant 0 : i32
    return %arg0, %c0_i32, %arg1 : i32, i32, i32
  }
  func.func @transform_1(%arg0: i32, %arg1: i32) -> (i32, i32, i32) {
    %c0_i32 = arith.constant 0 : i32
    %c0_i32_0 = arith.constant 0 : i32
    return %arg0, %c0_i32, %arg1 : i32, i32, i32
  }
  func.func @transform_2(%arg0: i32, %arg1: i32) -> (i32, i32, i32) {
    %c0_i32 = arith.constant 0 : i32
    %c0_i32_0 = arith.constant 0 : i32
    %c0_i32_1 = arith.constant 0 : i32
    return %arg0, %c0_i32, %c0_i32_0 : i32, i32, i32
  }
}

</mosaic_0001>

<llo_original>
// kernel: tpu_custom_call.1
$region0: #{tpu_custom_call.1}
  #allocation0 [shape = 'u32[]', space=smem, size = 0x4, offset = 0x4, fixed_abs, tag = 'smem constant byte address 0x4 - core index']
  #allocation1 [shape = 'u32[144,128]{1,0:T(1,128)}', space=vmem, size = 0x12000, scoped, tag = 'internal scratch']
  #allocation2 [shape = 'f32[1,256]{1,0:T(1,128)}', space=vmem, size = 0x400, scoped, tag = 'scratch operand']
  %s0 = inlined_call_operand.hbm [shape: f32[2,4,256], index: 0, kind: input, shape index: {}]
  %s1 = inlined_call_operand.hbm [shape: s32[2,1,256], index: 1, kind: input, shape index: {}]
  %s2 = inlined_call_operand.vmem [shape: f32[2,1,1], index: 2, kind: output, shape index: {}]
  %s3 = sld [smem:[#allocation0]]
  $region57: #{tpu_custom_call.1} parent=0
    _
  %s5 = ssub.s32 1, %s3
  %s6 = scalar_select 0, %s5, %s3
  $region1: #{tpu_custom_call.1} parent=0
    #allocation3 [shape = 'u8[8192]{0}', space=vmem, size = 0x2000, scoped, tag = 'input window, operand 0']
    #allocation4 [shape = 's32[2]{0}', space=sflag, size = 0x8, scoped, tag = 'scoped memory for tpu_custom_call.1']
    #allocation5 [shape = 'u8[2048]{0}', space=vmem, size = 0x800, scoped, tag = 'input window, operand 1']
    #allocation6 [shape = 's32[2]{0}', space=sflag, size = 0x8, scoped, tag = 'scoped memory for tpu_custom_call.1']
    %7 = vsyncpa [#allocation4], 0
    %s8 = scalar_lea.sflag [#allocation4], 1
    %9 = vsyncpa %s8, 0
    %10 = vsyncpa [#allocation6], 0
    %s11 = scalar_lea.sflag [#allocation6], 1
    %12 = vsyncpa %s11, 0
    loop: start=0, step=1, limit=4
    $region2: #{tpu_custom_call.1} parent=1 // loop_pre_header
      _
    $region3: #{tpu_custom_call.1} parent=1 // loop_header
      %s14 = sphi 0, %s18
      %p15 = scmp.ge.s32.totalorder %s14, 4
      %s21 = sphi 0, %s33
      %s22 = sphi 0, %s29
      %s23 = sphi 0, %s21
      %s24 = sphi 0, %s22
      %s25 = sphi 0, %s23
      %s26 = sphi 0, %s24
      %s38 = sphi 0, %s40
      %s41 = sphi 0, %s38
      %s42 = sphi 0, %s41
      %s58 = sphi 0, %s42
      %s66 = sphi 0, %s68
      %s69 = sphi 0, %s66
      %s70 = sphi 0, %s69
      %s86 = sphi 0, %s70
      %s92 = sphi 0, %s94
      %s95 = sphi 0, %s92
      %s96 = sphi 0, %s95
      %s112 = sphi 0, %s96
    $region4: #{tpu_custom_call.1} parent=1 // loop_header_branch
      %17 = sbr.rel (%p15) target = $region8
    $region5: #{tpu_custom_call.1} parent=1 // loop_body
      %s19 = ssub.s32 %s14, 1
      %s20 = ssub.s32 %s14, 2
      %s27 = sadd.s32 1, %s22
      %p28 = scmp.ge.s32.totalorder %s27, 1
      %s29 = scalar_select %p28, 0, %s27
      %s30 = sadd.s32 1, %s21
      %s31 = scalar_select %p28, %s30, %s21
      %p32 = scmp.ge.s32.totalorder %s31, 2
      %s33 = scalar_select %p32, 0, %s31
      %s34 = ssub.s32 %s21, %s33
      %s35 = ssub.s32 %s22, %s29
      %s36 = sor.u32 %s34, %s35
      %p37 = scmp.eq.s32.totalorder %s36, 0
      %s39 = sadd.s32 %s38, 1
      %s40 = scalar_select %p37, %s38, %s39
      %p43 = pneg %p37
      %p44 = scmp.eq.s32.totalorder %s14, 1
      %p45 = por %p43, %p44
      %p46 = scmp.ne.s32.totalorder %s38, %s41
      %p47 = scmp.eq.s32.totalorder %s14, 0
      %p48 = por %p46, %p47
      %p49 = scmp.ne.s32.totalorder %s38, %s41
      %p50 = scmp.eq.s32.totalorder %s19, 1
      %p51 = por %p49, %p50
      %p52 = scmp.ne.s32.totalorder %s41, %s42
      %p53 = scmp.eq.s32.totalorder %s19, 0
      %p54 = por %p52, %p53
      %p55 = scmp.ne.s32.totalorder %s41, %s42
      %p56 = scmp.eq.s32.totalorder %s20, 1
      %p57 = por %p55, %p56
      %p59 = scmp.ne.s32.totalorder %s42, %s58
      %p60 = scmp.eq.s32.totalorder %s20, 0
      %p61 = por %p59, %p60
      %s62 = ssub.s32 %s21, %s33
      %s63 = ssub.s32 %s22, %s29
      %s64 = sor.u32 %s62, %s63
      %p65 = scmp.eq.s32.totalorder %s64, 0
      %s67 = sadd.s32 %s66, 1
      %s68 = scalar_select %p65, %s66, %s67
      %p71 = pneg %p65
      %p72 = scmp.eq.s32.totalorder %s14, 1
      %p73 = por %p71, %p72
      %p74 = scmp.ne.s32.totalorder %s66, %s69
      %p75 = scmp.eq.s32.totalorder %s14, 0
      %p76 = por %p74, %p75
      %p77 = scmp.ne.s32.totalorder %s66, %s69
      %p78 = scmp.eq.s32.totalorder %s19, 1
      %p79 = por %p77, %p78
      %p80 = scmp.ne.s32.totalorder %s69, %s70
      %p81 = scmp.eq.s32.totalorder %s19, 0
      %p82 = por %p80, %p81
      %p83 = scmp.ne.s32.totalorder %s69, %s70
      %p84 = scmp.eq.s32.totalorder %s20, 1
      %p85 = por %p83, %p84
      %p87 = scmp.ne.s32.totalorder %s70, %s86
      %p88 = scmp.eq.s32.totalorder %s20, 0
      %p89 = por %p87, %p88
      %s90 = ssub.s32 %s21, %s33
      %p91 = scmp.eq.s32.totalorder %s90, 0
      %s93 = sadd.s32 %s92, 1
      %s94 = scalar_select %p91, %s92, %s93
      %p97 = pneg %p91
      %p98 = scmp.eq.s32.totalorder %s14, 1
      %p99 = por %p97, %p98
      %p100 = scmp.ne.s32.totalorder %s92, %s95
      %p101 = scmp.eq.s32.totalorder %s14, 0
      %p102 = por %p100, %p101
      %p103 = scmp.ne.s32.totalorder %s92, %s95
      %p104 = scmp.eq.s32.totalorder %s19, 1
      %p105 = por %p103, %p104
      %p106 = scmp.ne.s32.totalorder %s95, %s96
      %p107 = scmp.eq.s32.totalorder %s19, 0
      %p108 = por %p106, %p107
      %p109 = scmp.ne.s32.totalorder %s95, %s96
      %p110 = scmp.eq.s32.totalorder %s20, 1
      %p111 = por %p109, %p110
      %p113 = scmp.ne.s32.totalorder %s96, %s112
      %p114 = scmp.eq.s32.totalorder %s20, 0
      %p115 = por %p113, %p114
      %p116 = scmp.le.s32.totalorder 1, %s14
      %p117 = scmp.lt.s32.totalorder %s14, 3
      %p118 = pnand %p116, %p117
      %p119 = pneg %p118
      // Predicated region
      $region9: #{tpu_custom_call.1} parent=5 // pred_check
        _
      $region10: #{tpu_custom_call.1} parent=5 // pred_check_branch
        %121 = sbr.rel (%p118) target = $region12
      $region11: #{tpu_custom_call.1} parent=5 // pred_region
        %s122 = ssub.s32 %s14, 1
      $region12: #{tpu_custom_call.1} parent=5 // pred_fallthru
        _
      %p123 = scmp.lt.s32.totalorder %s14, 2
      // Predicated region
      $region13: #{tpu_custom_call.1} parent=5 // pred_check
        %p124 = pneg %p123
      $region14: #{tpu_custom_call.1} parent=5 // pred_check_branch
        %126 = sbr.rel (%p124) target = $region16
      $region15: #{tpu_custom_call.1} parent=5 // pred_region
        // Predicated region
        $region17: #{tpu_custom_call.1} parent=15 // pred_check
          %p127 = pneg %p48
        $region18: #{tpu_custom_call.1} parent=15 // pred_check_branch
          %129 = sbr.rel (%p127) target = $region20
        $region19: #{tpu_custom_call.1} parent=15 // pred_region
          %s130 = sand.u32 %s38, 1
          %s131 = scalar_lea.sflag [#allocation4], %s130
          %s132 = sand.u32 %s38, 1
          %s133 = smul.addr %s132, 8
          %s134 = scalar_lea.vmem [#allocation3], %s133
          %s135 = smul.u32 2, %s22
          %s137 = ssub.s32 128, 128
          %138 = vsyncadd %s131, %s137
          %s139 = smul.addr %s21, 2
          %s140 = sadd.s32 %s135, %s139
          %s141 = smul.addr %s140, 64
          %s142 = scalar_lea.hbm %s0, %s141
          %s144 = sshll.u32 %s134, 4
          %s145 = int_to_ptr.vmem [resolvable:$true] %s144
          %147 = dma.hbm_to_vmem [thread:$0]  %s142, 128, %s145, %s131
        $region20: #{tpu_custom_call.1} parent=15 // pred_fallthru
          _
        // Predicated region
        $region21: #{tpu_custom_call.1} parent=15 // pred_check
          %p148 = pneg %p76
        $region22: #{tpu_custom_call.1} parent=15 // pred_check_branch
          %150 = sbr.rel (%p148) target = $region24
        $region23: #{tpu_custom_call.1} parent=15 // pred_region
          %s151 = sand.u32 %s66, 1
          %s152 = scalar_lea.sflag [#allocation6], %s151
          %s153 = sand.u32 %s66, 1
          %s154 = smul.addr %s153, 2
          %s155 = scalar_lea.vmem [#allocation5], %s154
          %s156 = smul.u32 2, %s22
          %s158 = ssub.s32 32, 32
          %159 = vsyncadd %s152, %s158
          %s160 = smul.addr %s21, 2
          %s161 = sadd.s32 %s156, %s160
          %s162 = smul.addr %s161, 16
          %s163 = scalar_lea.hbm %s1, %s162
          %s165 = sshll.u32 %s155, 4
          %s166 = int_to_ptr.vmem [resolvable:$true] %s165
          %168 = dma.hbm_to_vmem [thread:$0]  %s163, 32, %s166, %s152
        $region24: #{tpu_custom_call.1} parent=15 // pred_fallthru
          _
      $region16: #{tpu_custom_call.1} parent=5 // pred_fallthru
        _
      %p169 = scmp.le.s32.totalorder 1, %s14
      %p170 = scmp.lt.s32.totalorder %s14, 3
      %p171 = pnand %p169, %p170
      %p172 = pneg %p171
      // Predicated region
      $region25: #{tpu_custom_call.1} parent=5 // pred_check
        _
      $region26: #{tpu_custom_call.1} parent=5 // pred_check_branch
        %174 = sbr.rel (%p171) target = $region28
      $region27: #{tpu_custom_call.1} parent=5 // pred_region
        %s175 = ssub.s32 %s14, 1
        %s176 = sand.u32 %s41, 1
        %s177 = scalar_lea.sflag [#allocation4], %s176
        %s178 = sand.u32 %s41, 1
        %s179 = smul.addr %s178, 8
        %s180 = scalar_lea.vmem [#allocation3], %s179
        // Predicated region
        $region29: #{tpu_custom_call.1} parent=27 // pred_check
          %p181 = pneg %p54
        $region30: #{tpu_custom_call.1} parent=27 // pred_check_branch
          %183 = sbr.rel (%p181) target = $region32
        $region31: #{tpu_custom_call.1} parent=27 // pred_region
          %184 = dma.done %s177, 128
        $region32: #{tpu_custom_call.1} parent=27 // pred_fallthru
          _
        %s185 = sand.u32 %s69, 1
        %s186 = scalar_lea.sflag [#allocation6], %s185
        %s187 = sand.u32 %s69, 1
        %s188 = smul.addr %s187, 2
        %s189 = scalar_lea.vmem [#allocation5], %s188
        // Predicated region
        $region33: #{tpu_custom_call.1} parent=27 // pred_check
          %p190 = pneg %p82
        $region34: #{tpu_custom_call.1} parent=27 // pred_check_branch
          %192 = sbr.rel (%p190) target = $region36
        $region35: #{tpu_custom_call.1} parent=27 // pred_region
          %193 = dma.done %s186, 32
        $region36: #{tpu_custom_call.1} parent=27 // pred_fallthru
          _
        %s194 = sand.u32 %s41, 1
        %s195 = scalar_lea.sflag [#allocation4], %s194
        %s196 = sand.u32 %s41, 1
        %s197 = smul.addr %s196, 8
        %s198 = scalar_lea.vmem [#allocation3], %s197
        %p199 = pneg %p54
        %p200 = pneg %p51
        %s201 = sand.u32 %s69, 1
        %s202 = scalar_lea.sflag [#allocation6], %s201
        %s203 = sand.u32 %s69, 1
        %s204 = smul.addr %s203, 2
        %s205 = scalar_lea.vmem [#allocation5], %s204
        %p206 = pneg %p82
        %p207 = pneg %p79
        %p208 = pneg %p108
        %p209 = pneg %p105
        %p210 = scmp.lt.s32.totalorder %s23, 1
        %s211 = scalar_select %p210, %s23, 1
        %s212 = scalar_lea.vmem %s2, %s211
        %s213 = smul.u32 2, %s24
        %s214 = smul.u32 2, %s24
        %p215 = scmp.lt.s32.totalorder %s23, 1
        %s216 = scalar_select %p215, %s23, 1
        %s217 = scalar_lea.vmem %s2, %s216
        %p218 = scmp.eq.s32.totalorder %s24, 0
        // Predicated region
        $region37: #{tpu_custom_call.1} parent=27 // pred_check
          %p219 = pneg %p218
        $region38: #{tpu_custom_call.1} parent=27 // pred_check_branch
          %221 = sbr.rel (%p219) target = $region40
        $region39: #{tpu_custom_call.1} parent=27 // pred_region
          %v222 = vlaneseq
          %vm223 = vcmp.ge.s32.totalorder %v222, 0
          %vm224 = vcmp.lt.s32.totalorder %v222, 256
          %vm225 = vmand %vm223, %vm224
          %226 = vst.msk [vmem:[#allocation2] sm:$0x3] %vm225, 0.0
        $region40: #{tpu_custom_call.1} parent=27 // pred_fallthru
          _
        %v227 = vld [vmem:[%s180] sm:$0xff]
        %v228 = vld [vmem:[%s189] sm:$0x3]
        %v230 = vrot.slane %v227, 5
        %v231 = vrot.slane %v230, 4
        %v233 = vmax.f32 %v227, %v231
        %v234 = vrot.slane %v227, 6
        %v235 = vrot.slane %v234, 4
        %v237 = vmax.f32 %v233, %v235
        %v238 = vrot.slane %v227, 7
        %v239 = vrot.slane %v238, 4
        %v241 = vmax.f32 %v237, %v239
        %v242 = vsub.f32 %v227, %v241
        %v243 = vmul.f32 %v242, 1.442695
        %v244 = vpow.pop %v243
        %vm245 = vcmp.eq.s32.totalorder %v228, 0
        %v247 = vunpack.c.l.s4 1966171168
        %v248 = vunpack.c.0.s8 %v247
        %v249 = vlaneseq
        %v250 = vshrl.u32 %v249, 7
        %v251 = vsub.s32 %v248, %v250
        %v252 = vrot.slane %v227, %v251
        %v254 = vunpack.c.l.s4 1966171168
        %v255 = vunpack.c.0.s8 %v254
        %v256 = vlaneseq
        %v257 = vshrl.u32 %v256, 7
        %v258 = vsub.s32 %v255, %v257
        %v259 = vrot.slane %v252, %v258
        %v261 = vsel %vm245, %v259, 0.0
        %v263 = vrot.slane %v241, 7
        %v265 = vsub.f32 %v227, %v263
        %v266 = vmul.f32 %v265, 1.442695
        %v267 = vpow.pop %v266
        %v269 = vrot.slane %v267, 5
        %v270 = vrot.slane %v269, 4
        %v272 = vadd.f32 %v244, %v270
        %vm273 = vcmp.eq.s32.totalorder %v228, 1
        %v274 = vcombine.high %v252, %v252
        %v276 = vunpack.c.l.s4 1966171168
        %v277 = vunpack.c.0.s8 %v276
        %v278 = vlaneseq
        %v279 = vshrl.u32 %v278, 7
        %v280 = vsub.s32 %v277, %v279
        %v281 = vrot.slane %v274, %v280
        %v283 = vsel %vm273, %v281, 0.0
        %v284 = vadd.f32 %v261, %v283
        %v285 = vrot.slane %v241, 6
        %v287 = vsub.f32 %v227, %v285
        %v288 = vmul.f32 %v287, 1.442695
        %v289 = vpow.pop %v288
        %v291 = vrot.slane %v289, 6
        %v292 = vrot.slane %v291, 4
        %v294 = vadd.f32 %v272, %v292
        %vm295 = vcmp.eq.s32.totalorder %v228, 2
        %v296 = vcombine.high %v259, %v259
        %v298 = vsel %vm295, %v296, 0.0
        %v299 = vadd.f32 %v284, %v298
        %v300 = vrot.slane %v241, 5
        %v302 = vsub.f32 %v227, %v300
        %v303 = vmul.f32 %v302, 1.442695
        %v304 = vpow.pop %v303
        %v306 = vrot.slane %v304, 7
        %v307 = vrot.slane %v306, 4
        %v309 = vadd.f32 %v294, %v307
        %vm310 = vcmp.eq.s32.totalorder %v228, 3
        %v311 = vcombine.high %v281, %v281
        %v313 = vsel %vm310, %v311, 0.0
        %v314 = vadd.f32 %v299, %v313
        %v315 = vlog2.pop %v309
        %v316 = vmul.f32 %v315, 0.6931472
        %v317 = vadd.f32 %v241, %v316
        %v318 = vld [vmem:[#allocation2] sm:$0x3]
        %v321 = vunpack.c.l.s4 286326784
        %v322 = vunpack.c.0.s8 %v321
        %v323 = vlaneseq
        %v324 = vshrl.u32 %v323, 7
        %v325 = vsub.s32 %v322, %v324
        %v326 = vrot.slane %v314, %v325
        %v328 = vsub.f32 %v317, %v326
        %v331 = vunpack.c.l.s4 1966171168
        %v332 = vunpack.c.0.s8 %v331
        %v333 = vlaneseq
        %v334 = vshrl.u32 %v333, 7
        %v335 = vsub.s32 %v332, %v334
        %v336 = vrot.slane %v328, %v335
        %v338 = vunpack.c.l.s4 1966171168
        %v339 = vunpack.c.0.s8 %v338
        %v340 = vlaneseq
        %v341 = vshrl.u32 %v340, 7
        %v342 = vsub.s32 %v339, %v341
        %v343 = vrot.slane %v336, %v342
        %v345 = vadd.f32 %v318, %v343
        %v346 = vlaneseq
        %vm347 = vcmp.ge.s32.totalorder %v346, 0
        %vm348 = vcmp.lt.s32.totalorder %v346, 256
        %vm349 = vmand %vm347, %vm348
        %350 = vst.msk [vmem:[#allocation2] sm:$0x3] %vm349, %v345
        // Predicated region
        $region41: #{tpu_custom_call.1} parent=27 // pred_check
          %p351 = pneg %p218
        $region42: #{tpu_custom_call.1} parent=27 // pred_check_branch
          %353 = sbr.rel (%p351) target = $region44
        $region43: #{tpu_custom_call.1} parent=27 // pred_region
          %v354 = vld [vmem:[#allocation2] sm:$0x3]
          %v356 = vlaneseq
          %v357 = vshrl.u32 %v356, 7
          %v358 = vsub.s32 0, %v357
          %v359 = vrot.slane %v354, %v358
          %v360 = vlaneseq
          %v361 = vshrl.u32 %v360, 7
          %v362 = vsub.s32 1, %v361
          %v363 = vrot.slane %v354, %v362
          %vm366 = vcmask 1040384
          %v367 = vsel %vm366, %v359, 0.0
          %v368 = vsel %vm366, %v363, 0.0
          %v369 = vadd.f32 %v367, %v368
          %370 = vadd.xlane.f32.xlu0 %v369
          %v371 = vpop.xlane.xlu0 %370
          %v372 = vrot.slane %v371, 4
          %v373 = vadd.f32 %v371, %v372
          %v374 = vrot.slane %v373, 2
          %v375 = vadd.f32 %v373, %v374
          %v376 = vrot.slane %v375, 1
          %v377 = vadd.f32 %v375, %v376
          %s378 = vtos %v377
          %v379 = vstv %s378
          %vm380 = vcmask 0
          %381 = vst.msk [vmem:[%s217] sm:$0x1] %vm380, %v379
        $region44: #{tpu_custom_call.1} parent=27 // pred_fallthru
          _
        %p382 = scmp.lt.s32.totalorder %s23, 1
        %s383 = scalar_select %p382, %s23, 1
        %s384 = scalar_lea.vmem %s2, %s383
        // Predicated region
        $region45: #{tpu_custom_call.1} parent=27 // pred_check
          %p385 = pneg %p105
        $region46: #{tpu_custom_call.1} parent=27 // pred_check_branch
          %387 = sbr.rel (%p385) target = $region48
        $region47: #{tpu_custom_call.1} parent=27 // pred_region
          _
        $region48: #{tpu_custom_call.1} parent=27 // pred_fallthru
          _
      $region28: #{tpu_custom_call.1} parent=5 // pred_fallthru
        _
      %p388 = scmp.le.s32.totalorder 2, %s14
      // Predicated region
      $region49: #{tpu_custom_call.1} parent=5 // pred_check
        %p389 = pneg %p388
      $region50: #{tpu_custom_call.1} parent=5 // pred_check_branch
        %391 = sbr.rel (%p389) target = $region52
      $region51: #{tpu_custom_call.1} parent=5 // pred_region
        %s392 = ssub.s32 %s14, 2
        // Predicated region
        $region53: #{tpu_custom_call.1} parent=51 // pred_check
          %p393 = pneg %p111
        $region54: #{tpu_custom_call.1} parent=51 // pred_check_branch
          %395 = sbr.rel (%p393) target = $region56
        $region55: #{tpu_custom_call.1} parent=51 // pred_region
          %p396 = scmp.lt.s32.totalorder %s25, 1
          %s397 = scalar_select %p396, %s25, 1
          %s398 = scalar_lea.vmem %s2, %s397
        $region56: #{tpu_custom_call.1} parent=51 // pred_fallthru
          _
      $region52: #{tpu_custom_call.1} parent=5 // pred_fallthru
        _
    $region6: #{tpu_custom_call.1} parent=1 // loop_footer
      %s18 = sadd.s32 1, %s14
    $region7: #{tpu_custom_call.1} parent=1 // loop_footer_branch
      %13 = sbr.rel target = $region3
    $region8: #{tpu_custom_call.1} parent=1 // loop_exit
      _
    %399 = vsyncpa [#allocation4], 1
    %s400 = scalar_lea.sflag [#allocation4], 1
    %401 = vsyncpa %s400, 1
    %402 = vsyncpa [#allocation6], 1
    %s403 = scalar_lea.sflag [#allocation6], 1
    %404 = vsyncpa %s403, 1

</llo_original>
